<compile_context>
chip_gen: v5e
topology: v5e:2x2
jax: 0.10.0
libtpu: 0.0.40
codegen_flags: <defaults>
</compile_context>

<pallas_src>
import functools

import jax
import jax.numpy as jnp
from jax.experimental import pallas as pl
from jax.experimental.pallas import tpu as pltpu


def _round_up(x, m):
    return (x + m - 1) // m * m


def _rnn_seq_kernel(x_ref, h0_ref, wx_ref, wh_ref, b_ref,
                    hfin_ref, logp_ref, hcarry_ref, *, valid_outputs):
    """One grid step == one RNN timestep.

    x_ref:      (BP, I)            input at timestep t (streamed block)
    h0_ref:     (BP, HPAD)         padded initial hidden (VMEM-resident)
    wx_ref:     (I, HPAD+OPAD)     fused [i2h | i2o] weight, input rows
    wh_ref:     (HPAD, HPAD+OPAD)  fused [i2h | i2o] weight, hidden rows
    b_ref:      (1, HPAD+OPAD)     fused bias
    hfin_ref:   (BP, HPAD)         final hidden output (written at t == T-1)
    logp_ref:   (BP, OPAD)         per-step log-softmax output (lane-dense)
    hcarry_ref: VMEM scratch (BP, HPAD) carrying hidden state across steps
    """
    t = pl.program_id(0)

    @pl.when(t == 0)
    def _init():
        hcarry_ref[...] = h0_ref[...].astype(jnp.float32)

    x = x_ref[...].astype(jnp.float32)
    h = hcarry_ref[...]

    # One fused matmul per LHS: columns [0:HPAD] hold the i2h output,
    # columns [HPAD:] the i2o output.  Accumulate in f32 on the MXU.
    z = (jnp.dot(x, wx_ref[...], preferred_element_type=jnp.float32)
         + jnp.dot(h, wh_ref[...], preferred_element_type=jnp.float32)
         + b_ref[...].astype(jnp.float32))

    hpad = hcarry_ref.shape[-1]
    # New hidden state: padding lanes H:HPAD are exactly zero by construction
    # (zero weight columns and zero bias), so no masking is needed.
    hcarry_ref[...] = z[:, :hpad]

    # log_softmax over the valid logit lanes only (lanes >= valid_outputs are
    # zero padding and must not contribute to max/sum).
    logits = z[:, hpad:]
    lane = jax.lax.broadcasted_iota(jnp.int32, logits.shape, dimension=1)
    valid = lane < valid_outputs
    masked = jnp.where(valid, logits, -jnp.inf)
    m = jnp.max(masked, axis=-1, keepdims=True)
    e = jnp.exp(masked - m)
    lse = jnp.log(jnp.sum(e, axis=-1, keepdims=True))
    logp_ref[...] = jnp.where(valid, masked - m - lse, 0.0).astype(logp_ref.dtype)

    @pl.when(t == pl.num_programs(0) - 1)
    def _finalize():
        hfin_ref[...] = hcarry_ref[...].astype(hfin_ref.dtype)


def prepare_params(w_i2h, b_i2h, w_i2o, b_i2o, input_size):
    """One-time weight preparation (hoisted off the recurrent hot path).

    PyTorch layouts: w_i2h (H, I+H), w_i2o (O, I+H), biases (H,), (O,).
    Returns fused, pre-transposed, lane-padded parameters:
      wx_f (I, HPAD+OPAD), wh_f (HPAD, HPAD+OPAD), b_f (1, HPAD+OPAD)
    with column layout [ i2h out (H) | zeros | i2o out (O) | zeros ].
    """
    H = w_i2h.shape[0]
    O = w_i2o.shape[0]
    I = input_size
    HPAD = _round_up(H, 128)
    OPAD = _round_up(O, 128)
    NPAD = HPAD + OPAD
    f32 = jnp.float32

    wx = jnp.zeros((I, NPAD), f32)
    wx = wx.at[:, :H].set(w_i2h[:, :I].T.astype(f32))
    wx = wx.at[:, HPAD:HPAD + O].set(w_i2o[:, :I].T.astype(f32))

    wh = jnp.zeros((HPAD, NPAD), f32)
    wh = wh.at[:H, :H].set(w_i2h[:, I:].T.astype(f32))
    wh = wh.at[:H, HPAD:HPAD + O].set(w_i2o[:, I:].T.astype(f32))

    b = jnp.zeros((1, NPAD), f32)
    b = b.at[0, :H].set(b_i2h.astype(f32))
    b = b.at[0, HPAD:HPAD + O].set(b_i2o.astype(f32))
    return wx, wh, b


@functools.partial(jax.jit, static_argnames=("output_size",))
def rnn_forward_sequence(xs, h0, wx_f, wh_f, b_f, *, output_size):
    """Run T RNN steps in a single fused pallas_call.

    xs: (T, B, I), h0: (B, H).
    Returns (log_probs (T, B, O), final_hidden (B, H)).
    """
    T, B, I = xs.shape
    H = h0.shape[-1]
    O = output_size
    HPAD, NPAD = wh_f.shape
    OPAD = NPAD - HPAD
    BP = _round_up(max(B, 1), 8)

    xs = xs.astype(jnp.float32)
    if BP != B:
        xs = jnp.pad(xs, ((0, 0), (0, BP - B), (0, 0)))
    h0_p = jnp.zeros((BP, HPAD), jnp.float32).at[:B, :H].set(h0.astype(jnp.float32))

    kernel = functools.partial(_rnn_seq_kernel, valid_outputs=O)

    hfin, logp = pl.pallas_call(
        kernel,
        out_shape=(
            jax.ShapeDtypeStruct((BP, HPAD), jnp.float32),     # final hidden
            jax.ShapeDtypeStruct((T, BP, OPAD), jnp.float32),  # per-step log-probs
        ),
        grid=(T,),
        in_specs=[
            pl.BlockSpec((None, BP, I), lambda t: (t, 0, 0)),  # stream x_t
            pl.BlockSpec((BP, HPAD), lambda t: (0, 0)),        # h0 (fetched once)
            pl.BlockSpec((I, NPAD), lambda t: (0, 0)),         # weights resident
            pl.BlockSpec((HPAD, NPAD), lambda t: (0, 0)),
            pl.BlockSpec((1, NPAD), lambda t: (0, 0)),
        ],
        out_specs=(
            pl.BlockSpec((BP, HPAD), lambda t: (0, 0)),        # written once at end
            pl.BlockSpec((None, BP, OPAD), lambda t: (t, 0, 0)),
        ),
        scratch_shapes=[pltpu.VMEM((BP, HPAD), jnp.float32)],  # hidden carry
        compiler_params=pltpu.CompilerParams(
            # The recurrence makes the time axis sequential.
            dimension_semantics=("arbitrary",),
            # Tiny footprint here; kept explicit so real-sized RNNs budget
            # against v7x's 64 MiB per-core VMEM rather than the 32 MiB default.
            vmem_limit_bytes=32 * 1024 * 1024,
        ),
    )(xs, h0_p, wx_f, wh_f, b_f)

    return logp[:, :B, :O], hfin[:B, :H]


def rnn_forward(x, hidden, wx_f, wh_f, b_f, *, output_size):
    """Single-step API matching the PyTorch module: returns (output, hidden)."""
    logp, h_new = rnn_forward_sequence(x[None], hidden, wx_f, wh_f, b_f,
                                       output_size=output_size)
    return logp[0], h_new


def init_linear_params(key, in_features, out_features, dtype=jnp.float32):
    """Deterministic PyTorch-style nn.Linear init: U(-1/sqrt(in), 1/sqrt(in))."""
    k_w, k_b = jax.random.split(key)
    bound = 1.0 / jnp.sqrt(jnp.array(in_features, dtype=jnp.float32))
    w = jax.random.uniform(k_w, (out_features, in_features), dtype,
                           minval=-bound, maxval=bound)
    b = jax.random.uniform(k_b, (out_features,), dtype,
                           minval=-bound, maxval=bound)
    return w, b


if __name__ == "__main__":
    batch = 2
    input_size = 16
    hidden_size = 32
    output_size = 8
    seq_len = 6

    key = jax.random.PRNGKey(0)
    k_x, k_seq, k_i2h, k_i2o = jax.random.split(key, 4)

    x = jax.random.normal(k_x, (batch, input_size), jnp.float32)
    xs = jax.random.normal(k_seq, (seq_len, batch, input_size), jnp.float32)
    h0 = jnp.zeros((batch, hidden_size), jnp.float32)  # initHidden equivalent

    w_i2h, b_i2h = init_linear_params(k_i2h, input_size + hidden_size, hidden_size)
    w_i2o, b_i2o = init_linear_params(k_i2o, input_size + hidden_size, output_size)

    # One-time weight prep (fused + transposed + padded) — off the hot path.
    wx_f, wh_f, b_f = prepare_params(w_i2h, b_i2h, w_i2o, b_i2o, input_size)

    # Pure-JAX reference of the module's forward.
    def ref_step(xi, hi):
        combined = jnp.concatenate([xi, hi], axis=1)
        h_new = combined @ w_i2h.T + b_i2h
        logits = combined @ w_i2o.T + b_i2o
        return jax.nn.log_softmax(logits, axis=-1), h_new

    # --- single step: exactly the module's forward(input, hidden) ---
    out1, h1 = rnn_forward(x, h0, wx_f, wh_f, b_f, output_size=output_size)
    jax.block_until_ready((out1, h1))
    ref_out1, ref_h1 = ref_step(x, h0)
    assert jnp.allclose(out1, ref_out1, atol=1e-4), "single-step output mismatch"
    assert jnp.allclose(h1, ref_h1, atol=1e-4), "single-step hidden mismatch"

    # --- fused multi-step sequence: one pallas_call for all timesteps ---
    logp_seq, h_fin = rnn_forward_sequence(xs, h0, wx_f, wh_f, b_f,
                                           output_size=output_size)
    jax.block_until_ready((logp_seq, h_fin))

    ref_h = h0
    ref_outs = []
    for t in range(seq_len):
        o, ref_h = ref_step(xs[t], ref_h)
        ref_outs.append(o)
    ref_outs = jnp.stack(ref_outs)
    assert jnp.allclose(logp_seq, ref_outs, atol=1e-3), "sequence output mismatch"
    assert jnp.allclose(h_fin, ref_h, atol=1e-3), "sequence hidden mismatch"

    print("KERNEL_OK")
</pallas_src>

<mosaic_0001>
module attributes {stable_mosaic.version = 11 : i64} {
  func.func @_rnn_seq_kernel(%arg0: i32, %arg1: memref<1x8x16xf32, #tpu.memory_space<vmem>>, %arg2: memref<8x128xf32, #tpu.memory_space<vmem>>, %arg3: memref<16x256xf32, #tpu.memory_space<vmem>>, %arg4: memref<128x256xf32, #tpu.memory_space<vmem>>, %arg5: memref<1x256xf32, #tpu.memory_space<vmem>>, %arg6: memref<8x128xf32, #tpu.memory_space<vmem>>, %arg7: memref<1x8x128xf32, #tpu.memory_space<vmem>>, %arg8: memref<8x128xf32, #tpu.memory_space<vmem>>) attributes {dimension_semantics = [#tpu.dimension_semantics<arbitrary>], iteration_bounds = array<i64: 1>, scalar_prefetch = 0 : i64, scratch_operands = 1 : i64, tpu.core_type = #tpu.core_type<tc>, window_params = [{transform_indices = @transform_0, window_bounds = array<i64: 1, 8, 16>}, {pipeline_mode = #tpu.pipeline_mode<synchronous>, transform_indices = @transform_1, window_bounds = array<i64: 8, 128>}, {pipeline_mode = #tpu.pipeline_mode<synchronous>, transform_indices = @transform_2, window_bounds = array<i64: 16, 256>}, {pipeline_mode = #tpu.pipeline_mode<synchronous>, transform_indices = @transform_3, window_bounds = array<i64: 128, 256>}, {pipeline_mode = #tpu.pipeline_mode<synchronous>, transform_indices = @transform_4, window_bounds = array<i64: 1, 256>}, {pipeline_mode = #tpu.pipeline_mode<synchronous>, transform_indices = @transform_5, window_bounds = array<i64: 8, 128>}, {transform_indices = @transform_6, window_bounds = array<i64: 1, 8, 128>}]} {
    %c0_i32 = arith.constant 0 : i32
    %0 = arith.cmpi eq, %arg0, %c0_i32 : i32
    %1 = arith.extui %0 : i1 to i32
    %c0_i32_0 = arith.constant 0 : i32
    %2 = arith.cmpi ne, %1, %c0_i32_0 : i32
    scf.if %2 {
      %c0_23 = arith.constant 0 : index
      %c0_24 = arith.constant 0 : index
      %42 = vector.load %arg2[%c0_23, %c0_24] : memref<8x128xf32, #tpu.memory_space<vmem>>, vector<8x128xf32>
      %c0_25 = arith.constant 0 : index
      %c0_26 = arith.constant 0 : index
      %43 = vector.load %arg8[%c0_25, %c0_26] : memref<8x128xf32, #tpu.memory_space<vmem>>, vector<8x128xf32>
      tpu.vector_store %arg8[%c0_25, %c0_26], %42 {strides = array<i32>} : memref<8x128xf32, #tpu.memory_space<vmem>>, vector<8x128xf32>,
    } else {
    }
    %c0 = arith.constant 0 : index
    %c0_1 = arith.constant 0 : index
    %c0_2 = arith.constant 0 : index
    %3 = vector.load %arg1[%c0, %c0_1, %c0_2] : memref<1x8x16xf32, #tpu.memory_space<vmem>>, vector<1x8x16xf32>
    %4 = vector.shape_cast %3 : vector<1x8x16xf32> to vector<8x16xf32>
    %c0_3 = arith.constant 0 : index
    %c0_4 = arith.constant 0 : index
    %5 = vector.load %arg8[%c0_3, %c0_4] : memref<8x128xf32, #tpu.memory_space<vmem>>, vector<8x128xf32>
    %c0_5 = arith.constant 0 : index
    %c0_6 = arith.constant 0 : index
    %6 = vector.load %arg3[%c0_5, %c0_6] : memref<16x256xf32, #tpu.memory_space<vmem>>, vector<16x256xf32>
    %cst = arith.constant dense<0.000000e+00> : vector<8x256xf32>
    %7 = tpu.matmul %4, %6, %cst {dimension_numbers = #tpu.dot_dimension_numbers<[1], [0], [0], [1], [0, 0, 1, 1], [], []>} : vector<8x16xf32>, vector<16x256xf32>, vector<8x256xf32> -> vector<8x256xf32>
    %c0_7 = arith.constant 0 : index
    %c0_8 = arith.constant 0 : index
    %8 = vector.load %arg4[%c0_7, %c0_8] : memref<128x256xf32, #tpu.memory_space<vmem>>, vector<128x256xf32>
    %cst_9 = arith.constant dense<0.000000e+00> : vector<8x256xf32>
    %9 = tpu.matmul %5, %8, %cst_9 {dimension_numbers = #tpu.dot_dimension_numbers<[1], [0], [0], [1], [0, 0, 1, 1], [], []>} : vector<8x128xf32>, vector<128x256xf32>, vector<8x256xf32> -> vector<8x256xf32>
    %10 = arith.addf %7, %9 : vector<8x256xf32>
    %c0_10 = arith.constant 0 : index
    %c0_11 = arith.constant 0 : index
    %11 = vector.load %arg5[%c0_10, %c0_11] : memref<1x256xf32, #tpu.memory_space<vmem>>, vector<1x256xf32>
    %12 = vector.broadcast %11 : vector<1x256xf32> to vector<8x256xf32>
    %13 = arith.addf %10, %12 : vector<8x256xf32>
    %14 = vector.extract_strided_slice %13 {offsets = [0, 0], sizes = [8, 128], strides = [1, 1]} : vector<8x256xf32> to vector<8x128xf32>
    %c0_12 = arith.constant 0 : index
    %c0_13 = arith.constant 0 : index
    %15 = vector.load %arg8[%c0_12, %c0_13] : memref<8x128xf32, #tpu.memory_space<vmem>>, vector<8x128xf32>
    tpu.vector_store %arg8[%c0_12, %c0_13], %14 {strides = array<i32>} : memref<8x128xf32, #tpu.memory_space<vmem>>, vector<8x128xf32>,
    %16 = vector.extract_strided_slice %13 {offsets = [0, 128], sizes = [8, 128], strides = [1, 1]} : vector<8x256xf32> to vector<8x128xf32>
    %17 = tpu.iota {dimensions = array<i32: 1>} : vector<8x128xi32>
    %c8_i32 = arith.constant 8 : i32
    %18 = vector.broadcast %c8_i32 : i32 to vector<8x128xi32>
    %19 = arith.cmpi slt, %17, %18 : vector<8x128xi32>
    %cst_14 = arith.constant 0xFF800000 : f32
    %20 = vector.broadcast %cst_14 : f32 to vector<8x128xf32>
    %21 = arith.select %19, %16, %20 : vector<8x128xi1>, vector<8x128xf32>
    %cst_15 = arith.constant dense<0xFF800000> : vector<8xf32>
    %22 = vector.multi_reduction <maximumf>, %21, %cst_15 [1] : vector<8x128xf32> to vector<8xf32>
    %23 = vector.shape_cast %22 : vector<8xf32> to vector<8x1xf32>
    %24 = vector.broadcast %23 : vector<8x1xf32> to vector<8x128xf32>
    %25 = arith.subf %21, %24 : vector<8x128xf32>
    %26 = math.exp %25 : vector<8x128xf32>
    %cst_16 = arith.constant dense<0.000000e+00> : vector<8xf32>
    %27 = vector.multi_reduction <add>, %26, %cst_16 [1] : vector<8x128xf32> to vector<8xf32>
    %28 = vector.shape_cast %27 : vector<8xf32> to vector<8x1xf32>
    %29 = math.log %28 : vector<8x1xf32>
    %30 = vector.broadcast %23 : vector<8x1xf32> to vector<8x128xf32>
    %31 = arith.subf %21, %30 : vector<8x128xf32>
    %32 = vector.broadcast %29 : vector<8x1xf32> to vector<8x128xf32>
    %33 = arith.subf %31, %32 : vector<8x128xf32>
    %cst_17 = arith.constant 0.000000e+00 : f32
    %34 = vector.broadcast %cst_17 : f32 to vector<8x128xf32>
    %35 = arith.select %19, %33, %34 : vector<8x128xi1>, vector<8x128xf32>
    %c0_18 = arith.constant 0 : index
    %c0_19 = arith.constant 0 : index
    %c0_20 = arith.constant 0 : index
    %36 = vector.load %arg7[%c0_18, %c0_19, %c0_20] : memref<1x8x128xf32, #tpu.memory_space<vmem>>, vector<1x8x128xf32>
    %37 = vector.shape_cast %36 : vector<1x8x128xf32> to vector<8x128xf32>
    %38 = vector.shape_cast %35 : vector<8x128xf32> to vector<1x8x128xf32>
    tpu.vector_store %arg7[%c0_18, %c0_19, %c0_20], %38 {strides = array<i32>} : memref<1x8x128xf32, #tpu.memory_space<vmem>>, vector<1x8x128xf32>,
    %c0_i32_21 = arith.constant 0 : i32
    %39 = arith.cmpi eq, %arg0, %c0_i32_21 : i32
    %40 = arith.extui %39 : i1 to i32
    %c0_i32_22 = arith.constant 0 : i32
    %41 = arith.cmpi ne, %40, %c0_i32_22 : i32
    scf.if %41 {
      %c0_23 = arith.constant 0 : index
      %c0_24 = arith.constant 0 : index
      %42 = vector.load %arg8[%c0_23, %c0_24] : memref<8x128xf32, #tpu.memory_space<vmem>>, vector<8x128xf32>
      %c0_25 = arith.constant 0 : index
      %c0_26 = arith.constant 0 : index
      %43 = vector.load %arg6[%c0_25, %c0_26] : memref<8x128xf32, #tpu.memory_space<vmem>>, vector<8x128xf32>
      tpu.vector_store %arg6[%c0_25, %c0_26], %42 {strides = array<i32>} : memref<8x128xf32, #tpu.memory_space<vmem>>, vector<8x128xf32>,
    } else {
    }
    return
  }
  func.func @transform_0(%arg0: i32) -> (i32, i32, i32) {
    %c0_i32 = arith.constant 0 : i32
    %c0_i32_0 = arith.constant 0 : i32
    %c0_i32_1 = arith.constant 0 : i32
    return %arg0, %c0_i32, %c0_i32_0 : i32, i32, i32
  }
  func.func @transform_1(%arg0: i32) -> (i32, i32) {
    %c0_i32 = arith.constant 0 : i32
    %c0_i32_0 = arith.constant 0 : i32
    %c0_i32_1 = arith.constant 0 : i32
    return %c0_i32, %c0_i32_0 : i32, i32
  }
  func.func @transform_2(%arg0: i32) -> (i32, i32) {
    %c0_i32 = arith.constant 0 : i32
    %c0_i32_0 = arith.constant 0 : i32
    %c0_i32_1 = arith.constant 0 : i32
    return %c0_i32, %c0_i32_0 : i32, i32
  }
  func.func @transform_3(%arg0: i32) -> (i32, i32) {
    %c0_i32 = arith.constant 0 : i32
    %c0_i32_0 = arith.constant 0 : i32
    %c0_i32_1 = arith.constant 0 : i32
    return %c0_i32, %c0_i32_0 : i32, i32
  }
  func.func @transform_4(%arg0: i32) -> (i32, i32) {
    %c0_i32 = arith.constant 0 : i32
    %c0_i32_0 = arith.constant 0 : i32
    %c0_i32_1 = arith.constant 0 : i32
    return %c0_i32, %c0_i32_0 : i32, i32
  }
  func.func @transform_5(%arg0: i32) -> (i32, i32) {
    %c0_i32 = arith.constant 0 : i32
    %c0_i32_0 = arith.constant 0 : i32
    %c0_i32_1 = arith.constant 0 : i32
    return %c0_i32, %c0_i32_0 : i32, i32
  }
  func.func @transform_6(%arg0: i32) -> (i32, i32, i32) {
    %c0_i32 = arith.constant 0 : i32
    %c0_i32_0 = arith.constant 0 : i32
    %c0_i32_1 = arith.constant 0 : i32
    return %arg0, %c0_i32, %c0_i32_0 : i32, i32, i32
  }
}

</mosaic_0001>

<llo_original>
// kernel: rnn_forward_sequence.1
$region0: #{rnn_forward_sequence.1}
  #allocation0 [shape = 'u32[]', space=smem, size = 0x4, offset = 0x4, fixed_abs, tag = 'smem constant byte address 0x4 - core index']
  #allocation1 [shape = 'u32[72,128]{1,0:T(1,128)}', space=vmem, size = 0x9000, scoped, tag = 'internal scratch']
  #allocation2 [shape = 'f32[8,128]{1,0:T(8,128)}', space=vmem, size = 0x1000, scoped, tag = 'scratch operand']
  %s0 = inlined_call_operand.vmem [shape: f32[1,8,16], index: 0, kind: input, shape index: {}]
  %s1 = inlined_call_operand.vmem [shape: f32[8,128], index: 1, kind: input, shape index: {}]
  %s2 = inlined_call_operand.hbm [shape: f32[16,256], index: 2, kind: input, shape index: {}]
  %s3 = inlined_call_operand.hbm [shape: f32[128,256], index: 3, kind: input, shape index: {}]
  %s4 = inlined_call_operand.vmem [shape: f32[1,256], index: 4, kind: input, shape index: {}]
  %s5 = inlined_call_operand.vmem [shape: f32[8,128], index: 5, kind: output, shape index: {0}]
  %s6 = inlined_call_operand.vmem [shape: f32[1,8,128], index: 6, kind: output, shape index: {1}]
  %7 = xla_tuple %s5, %s6
  %s8 = sld [smem:[#allocation0]]
  $region54: #{rnn_forward_sequence.1} parent=0
    _
  %s10 = ssub.s32 1, %s8
  %s11 = scalar_select 0, %s10, %s8
  $region1: #{rnn_forward_sequence.1} parent=0
    #allocation3 [shape = 'u8[16384]{0}', space=vmem, size = 0x4000, scoped, tag = 'input window, operand 2, single buffered']
    #allocation4 [shape = 's32[1]{0}', space=sflag, size = 0x4, scoped, tag = 'scoped memory for rnn_forward_sequence.1']
    #allocation5 [shape = 'u8[131072]{0}', space=vmem, size = 0x20000, scoped, tag = 'input window, operand 3, single buffered']
    #allocation6 [shape = 's32[1]{0}', space=sflag, size = 0x4, scoped, tag = 'scoped memory for rnn_forward_sequence.1']
    %12 = vsyncpa [#allocation4], 0
    %13 = vsyncpa [#allocation6], 0
    // Predicated region
    $region2: #{rnn_forward_sequence.1} parent=1 // pred_check
      _
    $region3: #{rnn_forward_sequence.1} parent=1 // pred_check_branch
      %15 = sbr.rel (0) target = $region5
    $region4: #{rnn_forward_sequence.1} parent=1 // pred_region
      _
    $region5: #{rnn_forward_sequence.1} parent=1 // pred_fallthru
      _
    // Predicated region
    $region6: #{rnn_forward_sequence.1} parent=1 // pred_check
      _
    $region7: #{rnn_forward_sequence.1} parent=1 // pred_check_branch
      %17 = sbr.rel (0) target = $region9
    $region8: #{rnn_forward_sequence.1} parent=1 // pred_region
      _
    $region9: #{rnn_forward_sequence.1} parent=1 // pred_fallthru
      _
    // Predicated region
    $region10: #{rnn_forward_sequence.1} parent=1 // pred_check
      _
    $region11: #{rnn_forward_sequence.1} parent=1 // pred_check_branch
      %19 = sbr.rel (0) target = $region13
    $region12: #{rnn_forward_sequence.1} parent=1 // pred_region
      %21 = vsyncadd [#allocation4], 0
      %s22 = sshll.u32 %s2, 4
      %s23 = int_to_ptr.hbm [resolvable:$true] %s22
      %s24 = sshll.u32 [#allocation3], 4
      %s25 = int_to_ptr.vmem [resolvable:$true] %s24
      %30 = dma.hbm_to_vmem [thread:$0]  %s23, 512, %s25, [#allocation4], 256, 256, 16
    $region13: #{rnn_forward_sequence.1} parent=1 // pred_fallthru
      _
    // Predicated region
    $region14: #{rnn_forward_sequence.1} parent=1 // pred_check
      _
    $region15: #{rnn_forward_sequence.1} parent=1 // pred_check_branch
      %32 = sbr.rel (0) target = $region17
    $region16: #{rnn_forward_sequence.1} parent=1 // pred_region
      %34 = vsyncadd [#allocation6], 0
      %s35 = sshll.u32 %s3, 4
      %s36 = int_to_ptr.hbm [resolvable:$true] %s35
      %s37 = sshll.u32 [#allocation5], 4
      %s38 = int_to_ptr.vmem [resolvable:$true] %s37
      %43 = dma.hbm_to_vmem [thread:$0]  %s36, 4096, %s38, [#allocation6], 256, 256, 16
    $region17: #{rnn_forward_sequence.1} parent=1 // pred_fallthru
      _
    // Predicated region
    $region18: #{rnn_forward_sequence.1} parent=1 // pred_check
      _
    $region19: #{rnn_forward_sequence.1} parent=1 // pred_check_branch
      %45 = sbr.rel (0) target = $region21
    $region20: #{rnn_forward_sequence.1} parent=1 // pred_region
      _
    $region21: #{rnn_forward_sequence.1} parent=1 // pred_fallthru
      _
    // Predicated region
    $region22: #{rnn_forward_sequence.1} parent=1 // pred_check
      _
    $region23: #{rnn_forward_sequence.1} parent=1 // pred_check_branch
      %47 = sbr.rel (0) target = $region25
    $region24: #{rnn_forward_sequence.1} parent=1 // pred_region
      %49 = dma.done [#allocation4], 512
    $region25: #{rnn_forward_sequence.1} parent=1 // pred_fallthru
      _
    // Predicated region
    $region26: #{rnn_forward_sequence.1} parent=1 // pred_check
      _
    $region27: #{rnn_forward_sequence.1} parent=1 // pred_check_branch
      %51 = sbr.rel (0) target = $region29
    $region28: #{rnn_forward_sequence.1} parent=1 // pred_region
      %53 = dma.done [#allocation6], 4096
    $region29: #{rnn_forward_sequence.1} parent=1 // pred_fallthru
      _
    %p54 = scmp.eq.s32.totalorder 0, 0
    // Predicated region
    $region30: #{rnn_forward_sequence.1} parent=1 // pred_check
      %p55 = pneg %p54
    $region31: #{rnn_forward_sequence.1} parent=1 // pred_check_branch
      %57 = sbr.rel (%p55) target = $region33
    $region32: #{rnn_forward_sequence.1} parent=1 // pred_region
      %v58 = vld [vmem:[%s1] sm:$0xff]
      %59 = vst [vmem:[#allocation2] sm:$0xff] %v58
    $region33: #{rnn_forward_sequence.1} parent=1 // pred_fallthru
      _
    %v60 = vld [vmem:[%s0] sm:$0xff]
    %v61 = vld [vmem:[#allocation2] sm:$0xff]
    %v62 = vld [vmem:[#allocation3] sm:$0xff]
    %v63 = vld [vmem:[#allocation3 + $0x8] sm:$0xff]
    %v64 = vld [vmem:[#allocation3 + $0x10] sm:$0xff]
    %v65 = vld [vmem:[#allocation3 + $0x18] sm:$0xff]
    %v66 = vld [vmem:[#allocation5] sm:$0xff]
    %v67 = vld [vmem:[#allocation5 + $0x8] sm:$0xff]
    %v68 = vld [vmem:[#allocation5 + $0x10] sm:$0xff]
    %v69 = vld [vmem:[#allocation5 + $0x18] sm:$0xff]
    %v70 = vld [vmem:[#allocation5 + $0x20] sm:$0xff]
    %v71 = vld [vmem:[#allocation5 + $0x28] sm:$0xff]
    %v72 = vld [vmem:[#allocation5 + $0x30] sm:$0xff]
    %v73 = vld [vmem:[#allocation5 + $0x38] sm:$0xff]
    %v74 = vld [vmem:[#allocation5 + $0x40] sm:$0xff]
    %v75 = vld [vmem:[#allocation5 + $0x48] sm:$0xff]
    %v76 = vld [vmem:[#allocation5 + $0x50] sm:$0xff]
    %v77 = vld [vmem:[#allocation5 + $0x58] sm:$0xff]
    %v78 = vld [vmem:[#allocation5 + $0x60] sm:$0xff]
    %v79 = vld [vmem:[#allocation5 + $0x68] sm:$0xff]
    %v80 = vld [vmem:[#allocation5 + $0x70] sm:$0xff]
    %v81 = vld [vmem:[#allocation5 + $0x78] sm:$0xff]
    %v82 = vld [vmem:[#allocation5 + $0x80] sm:$0xff]
    %v83 = vld [vmem:[#allocation5 + $0x88] sm:$0xff]
    %v84 = vld [vmem:[#allocation5 + $0x90] sm:$0xff]
    %v85 = vld [vmem:[#allocation5 + $0x98] sm:$0xff]
    %v86 = vld [vmem:[#allocation5 + $0xa0] sm:$0xff]
    %v87 = vld [vmem:[#allocation5 + $0xa8] sm:$0xff]
    %v88 = vld [vmem:[#allocation5 + $0xb0] sm:$0xff]
    %v89 = vld [vmem:[#allocation5 + $0xb8] sm:$0xff]
    %v90 = vld [vmem:[#allocation5 + $0xc0] sm:$0xff]
    %v91 = vld [vmem:[#allocation5 + $0xc8] sm:$0xff]
    %v92 = vld [vmem:[#allocation5 + $0xd0] sm:$0xff]
    %v93 = vld [vmem:[#allocation5 + $0xd8] sm:$0xff]
    %v94 = vld [vmem:[#allocation5 + $0xe0] sm:$0xff]
    %v95 = vld [vmem:[#allocation5 + $0xe8] sm:$0xff]
    %v96 = vld [vmem:[#allocation5 + $0xf0] sm:$0xff]
    %v97 = vld [vmem:[#allocation5 + $0xf8] sm:$0xff]
    %98 = vmatpush.msra.mxu0 %v96
    %99 = vmatpush.msra.mxu0 %v94
    %100 = vmatpush.msra.mxu0 %v92
    %101 = vmatpush.msra.mxu0 %v90
    %102 = vmatpush.msra.mxu0 %v88
    %103 = vmatpush.msra.mxu0 %v86
    %104 = vmatpush.msra.mxu0 %v84
    %105 = vmatpush.msra.mxu0 %v82
    %106 = vmatpush.msra.mxu0 %v80
    %107 = vmatpush.msra.mxu0 %v78
    %108 = vmatpush.msra.mxu0 %v76
    %109 = vmatpush.msra.mxu0 %v74
    %110 = vmatpush.msra.mxu0 %v72
    %111 = vmatpush.msra.mxu0 %v70
    %112 = vmatpush.msra.mxu0 %v68
    %113 = vmatpush.msra.mxu0 %v66
    %114 = vmatmul.f32.gmra.mxu0 %v61
    %v115 = vpop.f32.mrf.mxu0
    %v116 = vadd.f32 0.0, %v115
    %117 = vdwg.mxu0
    %118 = vmatpush.msra.mxu0 %v97
    %119 = vmatpush.msra.mxu0 %v95
    %120 = vmatpush.msra.mxu0 %v93
    %121 = vmatpush.msra.mxu0 %v91
    %122 = vmatpush.msra.mxu0 %v89
    %123 = vmatpush.msra.mxu0 %v87
    %124 = vmatpush.msra.mxu0 %v85
    %125 = vmatpush.msra.mxu0 %v83
    %126 = vmatpush.msra.mxu0 %v81
    %127 = vmatpush.msra.mxu0 %v79
    %128 = vmatpush.msra.mxu0 %v77
    %129 = vmatpush.msra.mxu0 %v75
    %130 = vmatpush.msra.mxu0 %v73
    %131 = vmatpush.msra.mxu0 %v71
    %132 = vmatpush.msra.mxu0 %v69
    %133 = vmatpush.msra.mxu0 %v67
    %134 = vmatmul.f32.gmra.mxu0 %v61
    %v135 = vpop.f32.mrf.mxu0
    %v136 = vadd.f32 0.0, %v135
    %137 = vdwg.mxu0
    %vm138 = vcmask 130048
    %v140 = vsel %vm138, %v60, 0
    %142 = vmatpush.msra.mxu0 0.0
    %143 = vmatpush.msra.mxu0 0.0
    %144 = vmatpush.msra.mxu0 0.0
    %145 = vmatpush.msra.mxu0 0.0
    %146 = vmatpush.msra.mxu0 0.0
    %147 = vmatpush.msra.mxu0 0.0
    %148 = vmatpush.msra.mxu0 0.0
    %149 = vmatpush.msra.mxu0 0.0
    %150 = vmatpush.msra.mxu0 0.0
    %151 = vmatpush.msra.mxu0 0.0
    %152 = vmatpush.msra.mxu0 0.0
    %153 = vmatpush.msra.mxu0 0.0
    %154 = vmatpush.msra.mxu0 0.0
    %155 = vmatpush.msra.mxu0 0.0
    %156 = vmatpush.msra.mxu0 %v64
    %157 = vmatpush.msra.mxu0 %v62
    %158 = vmatmul.f32.gmra.mxu0 %v140
    %v159 = vpop.f32.mrf.mxu0
    %v160 = vadd.f32 %v116, %v159
    %161 = vdwg.mxu0
    %162 = vmatpush.msra.mxu0 0.0
    %163 = vmatpush.msra.mxu0 0.0
    %164 = vmatpush.msra.mxu0 0.0
    %165 = vmatpush.msra.mxu0 0.0
    %166 = vmatpush.msra.mxu0 0.0
    %167 = vmatpush.msra.mxu0 0.0
    %168 = vmatpush.msra.mxu0 0.0
    %169 = vmatpush.msra.mxu0 0.0
    %170 = vmatpush.msra.mxu0 0.0
    %171 = vmatpush.msra.mxu0 0.0
    %172 = vmatpush.msra.mxu0 0.0
    %173 = vmatpush.msra.mxu0 0.0
    %174 = vmatpush.msra.mxu0 0.0
    %175 = vmatpush.msra.mxu0 0.0
    %176 = vmatpush.msra.mxu0 %v65
    %177 = vmatpush.msra.mxu0 %v63
    %178 = vmatmul.f32.gmra.mxu0 %v140
    %v179 = vpop.f32.mrf.mxu0
    %v180 = vadd.f32 %v136, %v179
    %181 = vdwg.mxu0
    %v182 = vld [vmem:[%s4] sm:$0x3]
    %v184 = vperm.slane %v182, 0
    %v185 = vperm.slane %v182, 1
    %v188 = vadd.f32 %v160, %v184
    %v189 = vadd.f32 %v180, %v185
    %190 = vst [vmem:[#allocation2] sm:$0xff] %v188
    %v191 = vlaneseq
    %v192 = vand.u32 %v191, 127
    %vm193 = vcmp.lt.s32.totalorder %v192, 8
    %v194 = vsel %vm193, %v189, -inf
    %195 = vmax.xlane.f32.xlu0 %v194
    %v196 = vpop.xlane.xlu0 %195
    %v197 = vsub.f32 %v194, %v196
    %v198 = vmul.f32 %v197, 1.442695
    %v199 = vpow.pop %v198
    %200 = vadd.xlane.f32.xlu0 %v199
    %v201 = vpop.xlane.xlu0 %200
    %v202 = vlog2.pop %v201
    %v203 = vmul.f32 %v202, 0.6931472
    %v204 = vsub.f32 %v197, %v203
    %v205 = vsel %vm193, %v204, 0.0
    %206 = vst [vmem:[%s6] sm:$0xff] %v205
    // Predicated region
    $region34: #{rnn_forward_sequence.1} parent=1 // pred_check
      %p207 = pneg %p54
    $region35: #{rnn_forward_sequence.1} parent=1 // pred_check_branch
      %209 = sbr.rel (%p207) target = $region37
    $region36: #{rnn_forward_sequence.1} parent=1 // pred_region
      %v210 = vld [vmem:[#allocation2] sm:$0xff]
      %211 = vst [vmem:[%s5] sm:$0xff] %v210
    $region37: #{rnn_forward_sequence.1} parent=1 // pred_fallthru
      _
    // Predicated region
    $region38: #{rnn_forward_sequence.1} parent=1 // pred_check
      _
    $region39: #{rnn_forward_sequence.1} parent=1 // pred_check_branch
      %213 = sbr.rel (0) target = $region41
    $region40: #{rnn_forward_sequence.1} parent=1 // pred_region
      _
    $region41: #{rnn_forward_sequence.1} parent=1 // pred_fallthru
      _
    // Predicated region
    $region42: #{rnn_forward_sequence.1} parent=1 // pred_check
      _
    $region43: #{rnn_forward_sequence.1} parent=1 // pred_check_branch
      %215 = sbr.rel (0) target = $region45
    $region44: #{rnn_forward_sequence.1} parent=1 // pred_region
      _
    $region45: #{rnn_forward_sequence.1} parent=1 // pred_fallthru
      _
    // Predicated region
    $region46: #{rnn_forward_sequence.1} parent=1 // pred_check
      _
    $region47: #{rnn_forward_sequence.1} parent=1 // pred_check_branch
      %217 = sbr.rel (0) target = $region49
    $region48: #{rnn_forward_sequence.1} parent=1 // pred_region
      _
    $region49: #{rnn_forward_sequence.1} parent=1 // pred_fallthru
      _
    // Predicated region
    $region50: #{rnn_forward_sequence.1} parent=1 // pred_check
      _
    $region51: #{rnn_forward_sequence.1} parent=1 // pred_check_branch
      %219 = sbr.rel (0) target = $region53
    $region52: #{rnn_forward_sequence.1} parent=1 // pred_region
      _
    $region53: #{rnn_forward_sequence.1} parent=1 // pred_fallthru
      _
    %220 = vsyncpa [#allocation4], 1
    %221 = vsyncpa [#allocation6], 1

</llo_original>
